<compile_context>
chip_gen: v6e
topology: v6e:2x2x1
jax: 0.10.0
libtpu: 0.0.40
codegen_flags: <defaults>
</compile_context>

<pallas_src>
import functools

import jax
import jax.numpy as jnp
from jax.experimental import pallas as pl
from jax.experimental.pallas import tpu as pltpu

IN_DIM = 2
HID_DIM = 15
OUT_DIM = 1

_HP = 16            # hidden dim padded to the sublane multiple
_PCOLS = 128        # packed-parameter lane width (exactly one lane tile)

# Packed-parameter column layout (W2^T lane-aligned at offset 0).
_W3_COL = 16        # (16,1) fc3 weight column (zero padded)
_B1_COL = 17        # (16,1) b1
_B2_COL = 18        # (16,1) b2
_W1C0_COL = 19      # (16,1) column 0 of W1^T
_W1C1_COL = 20      # (16,1) column 1 of W1^T
_B3_COL = 21        # scalar b3 at row 0


def _round_up(n, m):
    return ((n + m - 1) // m) * m


def _actor_kernel(x_ref, p_ref, o_ref):
    # x_ref: (2, TB)    batch on lanes
    # p_ref: (16, 128)  packed params (VMEM resident across grid steps)
    # o_ref: (1, TB)    lane-dense output row
    P = p_ref[...]
    xb = x_ref[...]

    w2t = P[:, 0:16]                       # (16,16) W2^T, lane offset 0
    w3c = P[:, _W3_COL:_W3_COL + 1]        # (16,1)  fc3 weights
    b1 = P[:, _B1_COL:_B1_COL + 1]         # (16,1)
    b2 = P[:, _B2_COL:_B2_COL + 1]         # (16,1)
    w1c0 = P[:, _W1C0_COL:_W1C0_COL + 1]   # (16,1)
    w1c1 = P[:, _W1C1_COL:_W1C1_COL + 1]   # (16,1)
    b3 = P[0:1, _B3_COL:_B3_COL + 1]       # (1,1)

    # fc1 + Gauss: K=2 contraction as two broadcast-FMAs on the VPU.
    h = w1c0 * xb[0:1, :] + w1c1 * xb[1:2, :] + b1      # (16, TB)
    h = jnp.exp(-h * h)

    # fc2 + Gauss on the MXU: (16,16) @ (16,TB).
    h = jnp.dot(w2t, h, preferred_element_type=jnp.float32) + b2
    h = jnp.exp(-h * h)

    # fc3: VPU multiply + sublane (XLU) reduction instead of a padded matmul.
    o_ref[...] = jnp.sum(w3c * h, axis=0, keepdims=True) + b3


def prepare_params(params):
    """Pack (and pad) all weights/biases once, outside the per-call hot path."""
    w1, b1, w2, b2, w3, b3 = params          # weights stored as (in, out)
    P = jnp.zeros((_HP, _PCOLS), jnp.float32)
    P = P.at[0:HID_DIM, 0:HID_DIM].set(w2.T.astype(jnp.float32))     # W2^T (15,15)
    P = P.at[0:HID_DIM, _W3_COL].set(w3.astype(jnp.float32)[:, 0])   # W3 column (15,)
    P = P.at[0:HID_DIM, _B1_COL].set(b1.astype(jnp.float32))         # b1
    P = P.at[0:HID_DIM, _B2_COL].set(b2.astype(jnp.float32))         # b2
    P = P.at[0:HID_DIM, _W1C0_COL].set(w1.astype(jnp.float32)[0, :]) # W1^T col 0
    P = P.at[0:HID_DIM, _W1C1_COL].set(w1.astype(jnp.float32)[1, :]) # W1^T col 1
    P = P.at[0, _B3_COL].set(b3.astype(jnp.float32)[0])              # b3
    return P


@functools.partial(jax.jit, static_argnames=("max_tile",))
def actor_forward_feature_major(xT, packed_params, *, max_tile=32768):
    """xT: (2, B) float32 (feature-major) -> (1, B) float32."""
    assert max_tile % 128 == 0 and max_tile > 0, "tile must be a positive multiple of 128"
    B = xT.shape[1]
    Bp = _round_up(max(B, 1), 128)

    if Bp <= 128:
        tb = Bp                                   # single 128-lane step
    else:
        # Aim for >= 2 grid steps (v7x megacore), cap the tile for VMEM.
        target = -(-Bp // 2)
        tb = min(max_tile, _round_up(target, 128))
        Bp = _round_up(Bp, tb)

    xTf = xT.astype(jnp.float32)
    if Bp != B:
        xTf = jnp.pad(xTf, ((0, 0), (0, Bp - B)))   # static pad, only when needed

    out = pl.pallas_call(
        _actor_kernel,
        out_shape=jax.ShapeDtypeStruct((1, Bp), jnp.float32),
        grid=(Bp // tb,),
        in_specs=[
            pl.BlockSpec((2, tb), lambda i: (0, i)),            # x tile per grid step
            pl.BlockSpec((_HP, _PCOLS), lambda i: (0, 0)),      # params stay resident
        ],
        out_specs=pl.BlockSpec((1, tb), lambda i: (0, i)),      # lane-dense output row
        compiler_params=pltpu.CompilerParams(
            dimension_semantics=("parallel",),
            vmem_limit_bytes=48 * 1024 * 1024),
    )(xTf, packed_params)

    return out[:, :B]                                            # (1, B)


@functools.partial(jax.jit, static_argnames=("max_tile",))
def actor_forward(x, packed_params, *, max_tile=32768):
    """x: (B, 2) float32 -> (B, 1) float32."""
    # TODO(synk): callers that can supply feature-major (2, B) input should use
    # actor_forward_feature_major directly and skip this HBM transpose pass.
    xT = x.astype(jnp.float32).T
    return actor_forward_feature_major(xT, packed_params, max_tile=max_tile).T


def init_params(key):
    """Deterministic init mirroring nn.Linear defaults: U(-1/sqrt(fan_in), +)."""
    ks = jax.random.split(key, 6)

    def linear(kw, kb, fan_in, fan_out):
        bound = 1.0 / jnp.sqrt(float(fan_in))
        w = jax.random.uniform(kw, (fan_in, fan_out), jnp.float32, -bound, bound)
        b = jax.random.uniform(kb, (fan_out,), jnp.float32, -bound, bound)
        return w, b

    w1, b1 = linear(ks[0], ks[1], IN_DIM, HID_DIM)
    w2, b2 = linear(ks[2], ks[3], HID_DIM, HID_DIM)
    w3, b3 = linear(ks[4], ks[5], HID_DIM, OUT_DIM)
    return (w1, b1, w2, b2, w3, b3)


def reference_forward(x, params):
    w1, b1, w2, b2, w3, b3 = params
    g = lambda t: jnp.exp(-t * t)
    h = g(x @ w1 + b1)
    h = g(h @ w2 + b2)
    return h @ w3 + b3


if __name__ == "__main__":
    key = jax.random.PRNGKey(0)
    pkey, xkey = jax.random.split(key)
    params = init_params(pkey)
    packed = prepare_params(params)          # packing/padding hoisted out of the hot path

    # Small primary check (batch = 8, features = 2) -> single 128-lane tile.
    B = 8
    x = jax.random.normal(xkey, (B, IN_DIM), jnp.float32)
    y = actor_forward(x, packed)
    jax.block_until_ready(y)
    y_ref = reference_forward(x, params)
    assert y.shape == (B, OUT_DIM), y.shape
    assert jnp.allclose(y, y_ref, atol=1e-5, rtol=1e-5), (y, y_ref)

    # Exercise the multi-step grid + padding/slicing path (grid=(3,), tb=128).
    B2 = 300
    x2 = jax.random.normal(jax.random.PRNGKey(1), (B2, IN_DIM), jnp.float32)
    y2 = actor_forward(x2, packed, max_tile=128)
    jax.block_until_ready(y2)
    y2_ref = reference_forward(x2, params)
    assert y2.shape == (B2, OUT_DIM), y2.shape
    assert jnp.allclose(y2, y2_ref, atol=1e-5, rtol=1e-5)

    # Default-tile path with a 2-step grid (tb=2560, grid=(2,)) + feature-major API.
    B3 = 5000
    x3 = jax.random.normal(jax.random.PRNGKey(2), (B3, IN_DIM), jnp.float32)
    y3 = actor_forward_feature_major(x3.T, packed)
    jax.block_until_ready(y3)
    y3_ref = reference_forward(x3, params)
    assert y3.shape == (OUT_DIM, B3), y3.shape
    assert jnp.allclose(y3.T, y3_ref, atol=1e-5, rtol=1e-5)

    print("KERNEL_OK")
</pallas_src>

<mosaic_0001>
module attributes {stable_mosaic.version = 11 : i64} {
  func.func @_actor_kernel(%arg0: i32, %arg1: memref<2x128xf32, #tpu.memory_space<vmem>>, %arg2: memref<16x128xf32, #tpu.memory_space<vmem>>, %arg3: memref<1x128xf32, #tpu.memory_space<vmem>>) attributes {dimension_semantics = [#tpu.dimension_semantics<parallel>], iteration_bounds = array<i64: 1>, scalar_prefetch = 0 : i64, scratch_operands = 0 : i64, tpu.core_type = #tpu.core_type<tc>, window_params = [{transform_indices = @transform_0, window_bounds = array<i64: 2, 128>}, {pipeline_mode = #tpu.pipeline_mode<synchronous>, transform_indices = @transform_1, window_bounds = array<i64: 16, 128>}, {transform_indices = @transform_2, window_bounds = array<i64: 1, 128>}]} {
    %c0 = arith.constant 0 : index
    %c0_0 = arith.constant 0 : index
    %0 = vector.load %arg2[%c0, %c0_0] : memref<16x128xf32, #tpu.memory_space<vmem>>, vector<16x128xf32>
    %c0_1 = arith.constant 0 : index
    %c0_2 = arith.constant 0 : index
    %1 = vector.load %arg1[%c0_1, %c0_2] : memref<2x128xf32, #tpu.memory_space<vmem>>, vector<2x128xf32>
    %2 = vector.extract_strided_slice %0 {offsets = [0, 0], sizes = [16, 16], strides = [1, 1]} : vector<16x128xf32> to vector<16x16xf32>
    %3 = vector.extract_strided_slice %0 {offsets = [0, 16], sizes = [16, 1], strides = [1, 1]} : vector<16x128xf32> to vector<16x1xf32>
    %4 = vector.extract_strided_slice %0 {offsets = [0, 17], sizes = [16, 1], strides = [1, 1]} : vector<16x128xf32> to vector<16x1xf32>
    %5 = vector.extract_strided_slice %0 {offsets = [0, 18], sizes = [16, 1], strides = [1, 1]} : vector<16x128xf32> to vector<16x1xf32>
    %6 = vector.extract_strided_slice %0 {offsets = [0, 19], sizes = [16, 1], strides = [1, 1]} : vector<16x128xf32> to vector<16x1xf32>
    %7 = vector.extract_strided_slice %0 {offsets = [0, 20], sizes = [16, 1], strides = [1, 1]} : vector<16x128xf32> to vector<16x1xf32>
    %8 = vector.extract_strided_slice %0 {offsets = [0, 21], sizes = [1, 1], strides = [1, 1]} : vector<16x128xf32> to vector<1x1xf32>
    %9 = vector.extract_strided_slice %1 {offsets = [0, 0], sizes = [1, 128], strides = [1, 1]} : vector<2x128xf32> to vector<1x128xf32>
    %10 = vector.broadcast %6 : vector<16x1xf32> to vector<16x128xf32>
    %11 = vector.broadcast %9 : vector<1x128xf32> to vector<16x128xf32>
    %12 = arith.mulf %10, %11 : vector<16x128xf32>
    %13 = vector.extract_strided_slice %1 {offsets = [1, 0], sizes = [1, 128], strides = [1, 1]} : vector<2x128xf32> to vector<1x128xf32>
    %14 = vector.broadcast %7 : vector<16x1xf32> to vector<16x128xf32>
    %15 = vector.broadcast %13 : vector<1x128xf32> to vector<16x128xf32>
    %16 = arith.mulf %14, %15 : vector<16x128xf32>
    %17 = arith.addf %12, %16 : vector<16x128xf32>
    %18 = vector.broadcast %4 : vector<16x1xf32> to vector<16x128xf32>
    %19 = arith.addf %17, %18 : vector<16x128xf32>
    %cst = arith.constant 0.000000e+00 : f32
    %20 = vector.broadcast %cst : f32 to vector<16x128xf32>
    %21 = arith.subf %20, %19 : vector<16x128xf32>
    %22 = arith.mulf %21, %19 : vector<16x128xf32>
    %23 = math.exp %22 : vector<16x128xf32>
    %cst_3 = arith.constant dense<0.000000e+00> : vector<16x128xf32>
    %24 = tpu.matmul %2, %23, %cst_3 {dimension_numbers = #tpu.dot_dimension_numbers<[1], [0], [0], [1], [0, 0, 1, 1], [], []>} : vector<16x16xf32>, vector<16x128xf32>, vector<16x128xf32> -> vector<16x128xf32>
    %25 = vector.broadcast %5 : vector<16x1xf32> to vector<16x128xf32>
    %26 = arith.addf %24, %25 : vector<16x128xf32>
    %cst_4 = arith.constant 0.000000e+00 : f32
    %27 = vector.broadcast %cst_4 : f32 to vector<16x128xf32>
    %28 = arith.subf %27, %26 : vector<16x128xf32>
    %29 = arith.mulf %28, %26 : vector<16x128xf32>
    %30 = math.exp %29 : vector<16x128xf32>
    %31 = vector.broadcast %3 : vector<16x1xf32> to vector<16x128xf32>
    %32 = arith.mulf %31, %30 : vector<16x128xf32>
    %cst_5 = arith.constant dense<0.000000e+00> : vector<128xf32>
    %33 = vector.multi_reduction <add>, %32, %cst_5 [0] : vector<16x128xf32> to vector<128xf32>
    %34 = vector.shape_cast %33 : vector<128xf32> to vector<1x128xf32>
    %35 = vector.broadcast %8 : vector<1x1xf32> to vector<1x128xf32>
    %36 = arith.addf %34, %35 : vector<1x128xf32>
    %c0_6 = arith.constant 0 : index
    %c0_7 = arith.constant 0 : index
    %37 = vector.load %arg3[%c0_6, %c0_7] : memref<1x128xf32, #tpu.memory_space<vmem>>, vector<1x128xf32>
    tpu.vector_store %arg3[%c0_6, %c0_7], %36 {strides = array<i32>} : memref<1x128xf32, #tpu.memory_space<vmem>>, vector<1x128xf32>,
    return
  }
  func.func @transform_0(%arg0: i32) -> (i32, i32) {
    %c0_i32 = arith.constant 0 : i32
    %c0_i32_0 = arith.constant 0 : i32
    return %c0_i32, %arg0 : i32, i32
  }
  func.func @transform_1(%arg0: i32) -> (i32, i32) {
    %c0_i32 = arith.constant 0 : i32
    %c0_i32_0 = arith.constant 0 : i32
    %c0_i32_1 = arith.constant 0 : i32
    return %c0_i32, %c0_i32_0 : i32, i32
  }
  func.func @transform_2(%arg0: i32) -> (i32, i32) {
    %c0_i32 = arith.constant 0 : i32
    %c0_i32_0 = arith.constant 0 : i32
    return %c0_i32, %arg0 : i32, i32
  }
}

</mosaic_0001>

<llo_original>
// kernel: actor_forward_feature_major.1
$region0: #{actor_forward_feature_major.1}
  #allocation0 [shape = 'u32[]', space=smem, size = 0x4, offset = 0x4, fixed_abs, tag = 'smem constant byte address 0x4 - core index']
  #allocation1 [shape = 'u32[144,128]{1,0:T(1,128)}', space=vmem, size = 0x12000, scoped, tag = 'internal scratch']
  %s0 = inlined_call_operand.vmem [shape: f32[2,128], index: 0, kind: input, shape index: {}]
  %s1 = inlined_call_operand.hbm [shape: f32[16,128], index: 1, kind: input, shape index: {}]
  %s2 = inlined_call_operand.hbm [shape: f32[1,128], index: 2, kind: output, shape index: {}]
  %s3 = sld [smem:[#allocation0]]
  $region22: #{actor_forward_feature_major.1} parent=0
    _
  %s5 = ssub.s32 1, %s3
  %s6 = scalar_select 0, %s5, %s3
  $region1: #{actor_forward_feature_major.1} parent=0
    #allocation2 [shape = 'u8[8192]{0}', space=vmem, size = 0x2000, scoped, tag = 'input window, operand 1, single buffered']
    #allocation3 [shape = 's32[1]{0}', space=sflag, size = 0x4, scoped, tag = 'scoped memory for actor_forward_feature_major.1']
    #allocation4 [shape = 's32[1]{0}', space=sflag, size = 0x4, scoped, tag = 'scoped memory for actor_forward_feature_major.1']
    #allocation5 [shape = 'u8[512]{0}', space=vmem, size = 0x400, scoped, tag = 'output window, operand 0, single buffered']
    %7 = vsyncpa [#allocation3], 0
    %8 = vsyncpa [#allocation4], 0
    // Predicated region
    $region2: #{actor_forward_feature_major.1} parent=1 // pred_check
      _
    $region3: #{actor_forward_feature_major.1} parent=1 // pred_check_branch
      %10 = sbr.rel (0) target = $region5
    $region4: #{actor_forward_feature_major.1} parent=1 // pred_region
      _
    $region5: #{actor_forward_feature_major.1} parent=1 // pred_fallthru
      _
    // Predicated region
    $region6: #{actor_forward_feature_major.1} parent=1 // pred_check
      _
    $region7: #{actor_forward_feature_major.1} parent=1 // pred_check_branch
      %12 = sbr.rel (0) target = $region9
    $region8: #{actor_forward_feature_major.1} parent=1 // pred_region
      %s14 = ssub.s32 256, 256
      %15 = vsyncadd [#allocation3], %s14
      %s16 = sshll.u32 [#allocation2], 4
      %s17 = int_to_ptr.vmem [resolvable:$true] %s16
      %22 = dma.hbm_to_vmem [thread:$0]  %s1, 256, %s17, [#allocation3], 128, 128, 8
    $region9: #{actor_forward_feature_major.1} parent=1 // pred_fallthru
      _
    // Predicated region
    $region10: #{actor_forward_feature_major.1} parent=1 // pred_check
      _
    $region11: #{actor_forward_feature_major.1} parent=1 // pred_check_branch
      %24 = sbr.rel (0) target = $region13
    $region12: #{actor_forward_feature_major.1} parent=1 // pred_region
      %25 = dma.done [#allocation3], 256
    $region13: #{actor_forward_feature_major.1} parent=1 // pred_fallthru
      _
    %v26 = vld [vmem:[#allocation2] sm:$0xff]
    %v27 = vld [vmem:[#allocation2 + $0x8] sm:$0xff]
    %v28 = vld [vmem:[%s0] sm:$0x3]
    %30 = vset.pattern.permute.xlu0 19
    %31 = vperm.xlu0 %30, %v26
    %v32 = vpop.permute.xlu0 %31
    %35 = vset.pattern.permute.xlu0 19
    %36 = vperm.xlu0 %35, %v27
    %v37 = vpop.permute.xlu0 %36
    %v39 = vlaneseq
    %v40 = vshrl.u32 %v39, 7
    %v41 = vsub.s32 0, %v40
    %v42 = vrot.slane %v28, %v41
    %v43 = vmul.f32 %v32, %v42
    %v44 = vmul.f32 %v37, %v42
    %45 = vset.pattern.permute.xlu0 20
    %46 = vperm.xlu0 %45, %v26
    %v47 = vpop.permute.xlu0 %46
    %49 = vset.pattern.permute.xlu0 20
    %50 = vperm.xlu0 %49, %v27
    %v51 = vpop.permute.xlu0 %50
    %v53 = vlaneseq
    %v54 = vshrl.u32 %v53, 7
    %v55 = vsub.s32 1, %v54
    %v56 = vrot.slane %v28, %v55
    %v57 = vmul.f32 %v47, %v56
    %v58 = vmul.f32 %v51, %v56
    %v59 = vadd.f32 %v43, %v57
    %v60 = vadd.f32 %v44, %v58
    %61 = vset.pattern.permute.xlu0 17
    %62 = vperm.xlu0 %61, %v26
    %v63 = vpop.permute.xlu0 %62
    %65 = vset.pattern.permute.xlu0 17
    %66 = vperm.xlu0 %65, %v27
    %v67 = vpop.permute.xlu0 %66
    %v69 = vadd.f32 %v59, %v63
    %v70 = vadd.f32 %v60, %v67
    %v71 = vsub.f32 0.0, %v69
    %v72 = vsub.f32 0.0, %v70
    %v73 = vmul.f32 %v71, %v69
    %v74 = vmul.f32 %v72, %v70
    %v75 = vmul.f32 %v73, 1.442695
    %v76 = vpow.pop %v75
    %v77 = vmul.f32 %v74, 1.442695
    %v78 = vpow.pop %v77
    %79 = vset.pattern.permute.xlu0 18
    %80 = vperm.xlu0 %79, %v26
    %v81 = vpop.permute.xlu0 %80
    %83 = vset.pattern.permute.xlu0 18
    %84 = vperm.xlu0 %83, %v27
    %v85 = vpop.permute.xlu0 %84
    %vm87 = vcmask 130048
    %v88 = vsel %vm87, %v26, 0
    %v90 = vsel %vm87, %v27, 0
    %92 = vmatprep.subr.mxu0 0.0
    %93 = vmatpush1.msra.mxu0 0.0
    %94 = vmatprep.subr.mxu0 0.0
    %95 = vmatpush1.msra.mxu0 0.0
    %96 = vmatprep.subr.mxu0 0.0
    %97 = vmatpush1.msra.mxu0 0.0
    %98 = vmatprep.subr.mxu0 0.0
    %99 = vmatpush1.msra.mxu0 0.0
    %100 = vmatprep.subr.mxu0 0.0
    %101 = vmatpush1.msra.mxu0 0.0
    %102 = vmatprep.subr.mxu0 0.0
    %103 = vmatpush1.msra.mxu0 0.0
    %104 = vmatprep.subr.mxu0 0.0
    %105 = vmatpush1.msra.mxu0 0.0
    %106 = vmatprep.subr.mxu0 0.0
    %107 = vmatpush1.msra.mxu0 0.0
    %108 = vmatprep.subr.mxu0 0.0
    %109 = vmatpush1.msra.mxu0 0.0
    %110 = vmatprep.subr.mxu0 0.0
    %111 = vmatpush1.msra.mxu0 0.0
    %112 = vmatprep.subr.mxu0 0.0
    %113 = vmatpush1.msra.mxu0 0.0
    %114 = vmatprep.subr.mxu0 0.0
    %115 = vmatpush1.msra.mxu0 0.0
    %116 = vmatprep.subr.mxu0 0.0
    %117 = vmatpush1.msra.mxu0 0.0
    %118 = vmatprep.subr.mxu0 0.0
    %119 = vmatpush1.msra.mxu0 0.0
    %120 = vmatprep.subr.mxu0 0.0
    %121 = vmatpush1.msra.mxu0 %v78
    %122 = vmatprep.subr.mxu0 0.0
    %123 = vmatpush1.msra.mxu0 %v76
    %124 = vmatprep.subr.mxu0 0.0
    %125 = vmatpush2.msra.mxu0 0.0
    %126 = vmatprep.subr.mxu0 0.0
    %127 = vmatpush2.msra.mxu0 0.0
    %128 = vmatprep.subr.mxu0 0.0
    %129 = vmatpush2.msra.mxu0 0.0
    %130 = vmatprep.subr.mxu0 0.0
    %131 = vmatpush2.msra.mxu0 0.0
    %132 = vmatprep.subr.mxu0 0.0
    %133 = vmatpush2.msra.mxu0 0.0
    %134 = vmatprep.subr.mxu0 0.0
    %135 = vmatpush2.msra.mxu0 0.0
    %136 = vmatprep.subr.mxu0 0.0
    %137 = vmatpush2.msra.mxu0 0.0
    %138 = vmatprep.subr.mxu0 0.0
    %139 = vmatpush2.msra.mxu0 0.0
    %140 = vmatprep.subr.mxu0 0.0
    %141 = vmatpush2.msra.mxu0 0.0
    %142 = vmatprep.subr.mxu0 0.0
    %143 = vmatpush2.msra.mxu0 0.0
    %144 = vmatprep.subr.mxu0 0.0
    %145 = vmatpush2.msra.mxu0 0.0
    %146 = vmatprep.subr.mxu0 0.0
    %147 = vmatpush2.msra.mxu0 0.0
    %148 = vmatprep.subr.mxu0 0.0
    %149 = vmatpush2.msra.mxu0 0.0
    %150 = vmatprep.subr.mxu0 0.0
    %151 = vmatpush2.msra.mxu0 0.0
    %152 = vmatprep.subr.mxu0 0.0
    %153 = vmatpush2.msra.mxu0 0.0
    %154 = vmatprep.subr.mxu0 0.0
    %155 = vmatpush2.msra.mxu0 0.0
    %156 = vmatprep.mubr.f32.mxu0 0.0
    %157 = vmatmul.mubr.f32.gmra.mxu0 %v88
    %v158 = vpop.f32.mrf.mxu0
    %v159 = vadd.f32 %v81, %v158
    %v160 = vpop.f32.mrf.mxu0
    %161 = vmatprep.mubr.f32.mxu0 0.0
    %162 = vmatmul.mubr.f32.gmra.mxu0 %v90
    %v163 = vpop.f32.mrf.mxu0
    %v164 = vadd.f32 %v85, %v163
    %v165 = vpop.f32.mrf.mxu0
    %166 = vdwg.mxu0
    %v167 = vsub.f32 0.0, %v159
    %v168 = vsub.f32 0.0, %v164
    %v169 = vmul.f32 %v167, %v159
    %v170 = vmul.f32 %v168, %v164
    %v171 = vmul.f32 %v169, 1.442695
    %v172 = vpow.pop %v171
    %v173 = vmul.f32 %v170, 1.442695
    %v174 = vpow.pop %v173
    %175 = vset.pattern.permute.xlu0 16
    %176 = vperm.xlu0 %175, %v26
    %v177 = vpop.permute.xlu0 %176
    %179 = vset.pattern.permute.xlu0 16
    %180 = vperm.xlu0 %179, %v27
    %v181 = vpop.permute.xlu0 %180
    %v183 = vmul.f32 %v177, %v172
    %v184 = vmul.f32 %v181, %v174
    %v185 = vadd.f32 %v183, %v184
    %v186 = vrot.slane %v185, 4
    %v187 = vadd.f32 %v185, %v186
    %v188 = vrot.slane %v187, 2
    %v189 = vadd.f32 %v187, %v188
    %v190 = vrot.slane %v189, 1
    %v191 = vadd.f32 %v189, %v190
    %192 = vset.pattern.permute.xlu0 21
    %193 = vperm.xlu0 %192, %v26
    %v194 = vpop.permute.xlu0 %193
    %v196 = vadd.f32 %v191, %v194
    %197 = vst [vmem:[#allocation5] sm:$0x1] %v196
    // Predicated region
    $region14: #{actor_forward_feature_major.1} parent=1 // pred_check
      _
    $region15: #{actor_forward_feature_major.1} parent=1 // pred_check_branch
      %199 = sbr.rel (0) target = $region17
    $region16: #{actor_forward_feature_major.1} parent=1 // pred_region
      %s201 = ssub.s32 16, 16
      %202 = vsyncadd [#allocation4], %s201
      %s204 = sshll.u32 [#allocation5], 4
      %s205 = int_to_ptr.vmem [resolvable:$true] %s204
      %207 = dma.vmem_to_hbm [thread:$0]  %s205, 16, %s2, [#allocation4]
    $region17: #{actor_forward_feature_major.1} parent=1 // pred_fallthru
      _
    // Predicated region
    $region18: #{actor_forward_feature_major.1} parent=1 // pred_check
      _
    $region19: #{actor_forward_feature_major.1} parent=1 // pred_check_branch
      %209 = sbr.rel (0) target = $region21
    $region20: #{actor_forward_feature_major.1} parent=1 // pred_region
      %210 = dma.done [#allocation4], 16
    $region21: #{actor_forward_feature_major.1} parent=1 // pred_fallthru
      _
    %211 = vsyncpa [#allocation3], 1
    %212 = vsyncpa [#allocation4], 1

</llo_original>
